<compile_context>
chip_gen: v5e
topology: v5e:2x2
jax: 0.10.0
libtpu: 0.0.40
codegen_flags: <defaults>
</compile_context>

<pallas_src>
import jax
import jax.numpy as jnp
from jax.experimental import pallas as pl
from jax.experimental.pallas import tpu as pltpu


def _round_up(x, m):
    return ((x + m - 1) // m) * m


def _rpn_fused_kernel(x_ref, w_ref, b_ref, out_ref):
    """One pixel tile: fused cls+bbox 1x1 conv as (5A, C) @ (C, tm) + bias.

    x_ref:   (C, tm)   activation tile (pixels on lanes)
    w_ref:   (5A, C)   fused [cls; bbox] weight, resident across the grid
    b_ref:   (5A, 1)   fused bias (broadcast over lanes)
    out_ref: (5A, tm)  fused output tile (lane-dense stores)
    """
    acc = jnp.dot(w_ref[...], x_ref[...], preferred_element_type=jnp.float32)
    out_ref[...] = (acc + b_ref[...]).astype(out_ref.dtype)


def _run_fused_head(x3d, w_fused, b_fused, *, tm):
    """x3d: (N, C, HWp) with HWp % tm == 0.  Returns (N, 5A, HWp)."""
    N, C, HWp = x3d.shape
    OUTC = w_fused.shape[0]
    assert HWp % tm == 0
    grid = (N, HWp // tm)
    return pl.pallas_call(
        _rpn_fused_kernel,
        out_shape=jax.ShapeDtypeStruct((N, OUTC, HWp), x3d.dtype),
        grid_spec=pltpu.PrefetchScalarGridSpec(
            num_scalar_prefetch=0,
            grid=grid,
            in_specs=[
                # activation tile: squeeze batch, full C, tm pixels on lanes
                pl.BlockSpec((None, C, tm), lambda n, j: (n, 0, j)),
                # fused weight / bias: full blocks, same index every step
                pl.BlockSpec((OUTC, C), lambda n, j: (0, 0)),
                pl.BlockSpec((OUTC, 1), lambda n, j: (0, 0)),
            ],
            out_specs=pl.BlockSpec((None, OUTC, tm), lambda n, j: (n, 0, j)),
        ),
        compiler_params=pltpu.CompilerParams(
            dimension_semantics=("parallel", "parallel")),
    )(x3d, w_fused, b_fused)


def rpn_head_conv_regressor(features, params, *, tm=512):
    """Forward pass.

    features: list/tuple of NCHW arrays (N, C, H, W), like the PyTorch module.
    params:   dict with 'w_cls' (A, C), 'b_cls' (A,),
                        'w_bbox' (4A, C), 'b_bbox' (4A,)  (PyTorch conv layout).
    Returns (logits, bbox_reg): lists of NCHW arrays (N, A, H, W) and
    (N, 4A, H, W), matching the PyTorch output layout.
    """
    assert isinstance(features, (list, tuple))
    A = params["w_cls"].shape[0]
    # Fuse the two heads once: (5A, C) weight, (5A, 1) bias.
    w_fused = jnp.concatenate([params["w_cls"], params["w_bbox"]], axis=0)
    b_fused = jnp.concatenate([params["b_cls"], params["b_bbox"]], axis=0)[:, None]
    outc = w_fused.shape[0]

    logits, bbox_reg = [], []
    for y in features:
        N, C, H, W = y.shape
        hw = H * W
        # Per-level tile: clip to the (lane-rounded) pixel count, then pad
        # the pixel axis so the grid divides evenly (masked-free tail).
        tm_eff = min(tm, _round_up(hw, 128))
        hw_pad = _round_up(hw, tm_eff)
        x3d = y.reshape(N, C, hw)                      # free, contiguous
        if hw_pad != hw:
            x3d = jnp.pad(x3d, ((0, 0), (0, 0), (0, hw_pad - hw)))
        out = _run_fused_head(x3d, w_fused, b_fused, tm=tm_eff)
        out = out[:, :, :hw].reshape(N, outc, H, W)    # already channel-major
        logits.append(out[:, :A])
        bbox_reg.append(out[:, A:])
    return logits, bbox_reg


def init_params(key, in_channels, num_anchors, dtype=jnp.float32):
    """Deterministic init matching the PyTorch module:
    weight ~ Normal(0, 0.01), bias = 0.  Stored in PyTorch conv orientation
    (out_channels, in_channels)."""
    k_cls, k_bbox = jax.random.split(key)
    w_cls = (0.01 * jax.random.normal(
        k_cls, (num_anchors, in_channels), jnp.float32)).astype(dtype)
    w_bbox = (0.01 * jax.random.normal(
        k_bbox, (num_anchors * 4, in_channels), jnp.float32)).astype(dtype)
    return {
        "w_cls": w_cls,                                   # (A, C)
        "b_cls": jnp.zeros((num_anchors,), dtype),        # (A,)
        "w_bbox": w_bbox,                                 # (4A, C)
        "b_bbox": jnp.zeros((num_anchors * 4,), dtype),   # (4A,)
    }


def _reference_forward(features, params):
    """Plain-JAX reference of the 1x1-conv heads for correctness check."""
    logits, bbox_reg = [], []
    for y in features:
        cls = jnp.einsum("nchw,ac->nahw", y, params["w_cls"]) \
            + params["b_cls"][None, :, None, None]
        bbox = jnp.einsum("nchw,ac->nahw", y, params["w_bbox"]) \
            + params["b_bbox"][None, :, None, None]
        logits.append(cls)
        bbox_reg.append(bbox)
    return logits, bbox_reg


if __name__ == "__main__":
    key = jax.random.PRNGKey(0)
    k_p, k_x0, k_x1, k_x2 = jax.random.split(key, 4)

    in_channels = 4
    num_anchors = 3
    params = init_params(k_p, in_channels, num_anchors)

    # Three FPN-like levels (NCHW). The last one has H*W not a multiple of
    # 128 to exercise the padded-tail path.
    x0 = jax.random.normal(k_x0, (2, in_channels, 16, 16), jnp.float32)
    x1 = jax.random.normal(k_x1, (2, in_channels, 8, 8), jnp.float32)
    x2 = jax.random.normal(k_x2, (2, in_channels, 10, 10), jnp.float32)
    features = [x0, x1, x2]

    logits, bbox_reg = rpn_head_conv_regressor(features, params)
    jax.block_until_ready(logits)
    jax.block_until_ready(bbox_reg)

    # Correctness check against plain-JAX reference.
    ref_logits, ref_bbox = _reference_forward(features, params)
    for a, b in zip(logits, ref_logits):
        assert a.shape == b.shape and a.dtype == b.dtype
        assert jnp.allclose(a, b, atol=1e-5, rtol=1e-5)
    for a, b in zip(bbox_reg, ref_bbox):
        assert a.shape == b.shape and a.dtype == b.dtype
        assert jnp.allclose(a, b, atol=1e-5, rtol=1e-5)

    print("KERNEL_OK")
</pallas_src>

<mosaic_0001>
module attributes {stable_mosaic.version = 11 : i64} {
  func.func @_rpn_fused_kernel(%arg0: i32, %arg1: i32, %arg2: memref<1x4x256xf32, #tpu.memory_space<vmem>>, %arg3: memref<15x4xf32, #tpu.memory_space<vmem>>, %arg4: memref<15x1xf32, #tpu.memory_space<vmem>>, %arg5: memref<1x15x256xf32, #tpu.memory_space<vmem>>) attributes {dimension_semantics = [#tpu.dimension_semantics<parallel>, #tpu.dimension_semantics<parallel>], iteration_bounds = array<i64: 2, 1>, scalar_prefetch = 0 : i64, scratch_operands = 0 : i64, tpu.core_type = #tpu.core_type<tc>, window_params = [{transform_indices = @transform_0, window_bounds = array<i64: 1, 4, 256>}, {pipeline_mode = #tpu.pipeline_mode<synchronous>, transform_indices = @transform_1, window_bounds = array<i64: 15, 4>}, {pipeline_mode = #tpu.pipeline_mode<synchronous>, transform_indices = @transform_2, window_bounds = array<i64: 15, 1>}, {transform_indices = @transform_3, window_bounds = array<i64: 1, 15, 256>}]} {
    %c0 = arith.constant 0 : index
    %c0_0 = arith.constant 0 : index
    %0 = vector.load %arg3[%c0, %c0_0] : memref<15x4xf32, #tpu.memory_space<vmem>>, vector<15x4xf32>
    %c0_1 = arith.constant 0 : index
    %c0_2 = arith.constant 0 : index
    %c0_3 = arith.constant 0 : index
    %1 = vector.load %arg2[%c0_1, %c0_2, %c0_3] : memref<1x4x256xf32, #tpu.memory_space<vmem>>, vector<1x4x256xf32>
    %2 = vector.shape_cast %1 : vector<1x4x256xf32> to vector<4x256xf32>
    %cst = arith.constant dense<0.000000e+00> : vector<15x256xf32>
    %3 = tpu.matmul %0, %2, %cst {dimension_numbers = #tpu.dot_dimension_numbers<[1], [0], [0], [1], [0, 0, 1, 1], [], []>} : vector<15x4xf32>, vector<4x256xf32>, vector<15x256xf32> -> vector<15x256xf32>
    %c0_4 = arith.constant 0 : index
    %c0_5 = arith.constant 0 : index
    %4 = vector.load %arg4[%c0_4, %c0_5] : memref<15x1xf32, #tpu.memory_space<vmem>>, vector<15x1xf32>
    %5 = vector.broadcast %4 : vector<15x1xf32> to vector<15x256xf32>
    %6 = arith.addf %3, %5 : vector<15x256xf32>
    %c0_6 = arith.constant 0 : index
    %c0_7 = arith.constant 0 : index
    %c0_8 = arith.constant 0 : index
    %7 = vector.load %arg5[%c0_6, %c0_7, %c0_8] : memref<1x15x256xf32, #tpu.memory_space<vmem>>, vector<1x15x256xf32>
    %8 = vector.shape_cast %7 : vector<1x15x256xf32> to vector<15x256xf32>
    %9 = vector.shape_cast %6 : vector<15x256xf32> to vector<1x15x256xf32>
    tpu.vector_store %arg5[%c0_6, %c0_7, %c0_8], %9 {strides = array<i32>} : memref<1x15x256xf32, #tpu.memory_space<vmem>>, vector<1x15x256xf32>,
    return
  }
  func.func @transform_0(%arg0: i32, %arg1: i32) -> (i32, i32, i32) {
    %c0_i32 = arith.constant 0 : i32
    %c0_i32_0 = arith.constant 0 : i32
    return %arg0, %c0_i32, %arg1 : i32, i32, i32
  }
  func.func @transform_1(%arg0: i32, %arg1: i32) -> (i32, i32) {
    %c0_i32 = arith.constant 0 : i32
    %c0_i32_0 = arith.constant 0 : i32
    %c0_i32_1 = arith.constant 0 : i32
    return %c0_i32, %c0_i32_0 : i32, i32
  }
  func.func @transform_2(%arg0: i32, %arg1: i32) -> (i32, i32) {
    %c0_i32 = arith.constant 0 : i32
    %c0_i32_0 = arith.constant 0 : i32
    %c0_i32_1 = arith.constant 0 : i32
    return %c0_i32, %c0_i32_0 : i32, i32
  }
  func.func @transform_3(%arg0: i32, %arg1: i32) -> (i32, i32, i32) {
    %c0_i32 = arith.constant 0 : i32
    %c0_i32_0 = arith.constant 0 : i32
    return %arg0, %c0_i32, %arg1 : i32, i32, i32
  }
}

</mosaic_0001>

<llo_original>
// kernel: tpu_custom_call.1
$region0: #{tpu_custom_call.1}
  #allocation0 [shape = 'u32[]', space=smem, size = 0x4, offset = 0x4, fixed_abs, tag = 'smem constant byte address 0x4 - core index']
  #allocation1 [shape = 'u32[72,128]{1,0:T(1,128)}', space=vmem, size = 0x9000, scoped, tag = 'internal scratch']
  %s0 = inlined_call_operand.vmem [shape: f32[2,4,256], index: 0, kind: input, shape index: {}]
  %s1 = inlined_call_operand.vmem [shape: f32[15,4], index: 1, kind: input, shape index: {}]
  %s2 = inlined_call_operand.vmem [shape: f32[15,1], index: 2, kind: input, shape index: {}]
  %s3 = inlined_call_operand.vmem [shape: f32[2,15,256], index: 3, kind: output, shape index: {}]
  %s4 = sld [smem:[#allocation0]]
  $region45: #{tpu_custom_call.1} parent=0
    _
  %s6 = ssub.s32 1, %s4
  %s7 = scalar_select 0, %s6, %s4
  loop: start=0, step=1, limit=4
  $region2: #{tpu_custom_call.1} parent=0 // loop_pre_header
    _
  $region3: #{tpu_custom_call.1} parent=0 // loop_header
    %s9 = sphi 0, %s13
    %p10 = scmp.ge.s32.totalorder %s9, 4
    %s16 = sphi 0, %s28
    %s17 = sphi 0, %s24
    %s18 = sphi 0, %s16
    %s19 = sphi 0, %s17
    %s20 = sphi 0, %s18
    %s21 = sphi 0, %s19
    %s33 = sphi 0, %s35
    %s36 = sphi 0, %s33
    %s37 = sphi 0, %s36
    %s53 = sphi 0, %s37
    %s57 = sphi 0, %s57
    %s59 = sphi 0, %s57
    %s60 = sphi 0, %s59
    %s74 = sphi 0, %s60
    %s78 = sphi 0, %s78
    %s80 = sphi 0, %s78
    %s81 = sphi 0, %s80
    %s95 = sphi 0, %s81
    %s103 = sphi 0, %s105
    %s106 = sphi 0, %s103
    %s107 = sphi 0, %s106
    %s123 = sphi 0, %s107
  $region4: #{tpu_custom_call.1} parent=0 // loop_header_branch
    %12 = sbr.rel (%p10) target = $region8
  $region5: #{tpu_custom_call.1} parent=0 // loop_body
    %s14 = ssub.s32 %s9, 1
    %s15 = ssub.s32 %s9, 2
    %s22 = sadd.s32 1, %s17
    %p23 = scmp.ge.s32.totalorder %s22, 1
    %s24 = scalar_select %p23, 0, %s22
    %s25 = sadd.s32 1, %s16
    %s26 = scalar_select %p23, %s25, %s16
    %p27 = scmp.ge.s32.totalorder %s26, 2
    %s28 = scalar_select %p27, 0, %s26
    %s29 = ssub.s32 %s16, %s28
    %s30 = ssub.s32 %s17, %s24
    %s31 = sor.u32 %s29, %s30
    %p32 = scmp.eq.s32.totalorder %s31, 0
    %s34 = sadd.s32 %s33, 1
    %s35 = scalar_select %p32, %s33, %s34
    %p38 = pneg %p32
    %p39 = scmp.eq.s32.totalorder %s9, 1
    %p40 = por %p38, %p39
    %p41 = scmp.ne.s32.totalorder %s33, %s36
    %p42 = scmp.eq.s32.totalorder %s9, 0
    %p43 = por %p41, %p42
    %p44 = scmp.ne.s32.totalorder %s33, %s36
    %p45 = scmp.eq.s32.totalorder %s14, 1
    %p46 = por %p44, %p45
    %p47 = scmp.ne.s32.totalorder %s36, %s37
    %p48 = scmp.eq.s32.totalorder %s14, 0
    %p49 = por %p47, %p48
    %p50 = scmp.ne.s32.totalorder %s36, %s37
    %p51 = scmp.eq.s32.totalorder %s15, 1
    %p52 = por %p50, %p51
    %p54 = scmp.ne.s32.totalorder %s37, %s53
    %p55 = scmp.eq.s32.totalorder %s15, 0
    %p56 = por %p54, %p55
    %s58 = sadd.s32 %s57, 1
    %p61 = scmp.eq.s32.totalorder %s9, 1
    %p62 = scmp.ne.s32.totalorder %s57, %s59
    %p63 = scmp.eq.s32.totalorder %s9, 0
    %p64 = por %p62, %p63
    %p65 = scmp.ne.s32.totalorder %s57, %s59
    %p66 = scmp.eq.s32.totalorder %s14, 1
    %p67 = por %p65, %p66
    %p68 = scmp.ne.s32.totalorder %s59, %s60
    %p69 = scmp.eq.s32.totalorder %s14, 0
    %p70 = por %p68, %p69
    %p71 = scmp.ne.s32.totalorder %s59, %s60
    %p72 = scmp.eq.s32.totalorder %s15, 1
    %p73 = por %p71, %p72
    %p75 = scmp.ne.s32.totalorder %s60, %s74
    %p76 = scmp.eq.s32.totalorder %s15, 0
    %p77 = por %p75, %p76
    %s79 = sadd.s32 %s78, 1
    %p82 = scmp.eq.s32.totalorder %s9, 1
    %p83 = scmp.ne.s32.totalorder %s78, %s80
    %p84 = scmp.eq.s32.totalorder %s9, 0
    %p85 = por %p83, %p84
    %p86 = scmp.ne.s32.totalorder %s78, %s80
    %p87 = scmp.eq.s32.totalorder %s14, 1
    %p88 = por %p86, %p87
    %p89 = scmp.ne.s32.totalorder %s80, %s81
    %p90 = scmp.eq.s32.totalorder %s14, 0
    %p91 = por %p89, %p90
    %p92 = scmp.ne.s32.totalorder %s80, %s81
    %p93 = scmp.eq.s32.totalorder %s15, 1
    %p94 = por %p92, %p93
    %p96 = scmp.ne.s32.totalorder %s81, %s95
    %p97 = scmp.eq.s32.totalorder %s15, 0
    %p98 = por %p96, %p97
    %s99 = ssub.s32 %s16, %s28
    %s100 = ssub.s32 %s17, %s24
    %s101 = sor.u32 %s99, %s100
    %p102 = scmp.eq.s32.totalorder %s101, 0
    %s104 = sadd.s32 %s103, 1
    %s105 = scalar_select %p102, %s103, %s104
    %p108 = pneg %p102
    %p109 = scmp.eq.s32.totalorder %s9, 1
    %p110 = por %p108, %p109
    %p111 = scmp.ne.s32.totalorder %s103, %s106
    %p112 = scmp.eq.s32.totalorder %s9, 0
    %p113 = por %p111, %p112
    %p114 = scmp.ne.s32.totalorder %s103, %s106
    %p115 = scmp.eq.s32.totalorder %s14, 1
    %p116 = por %p114, %p115
    %p117 = scmp.ne.s32.totalorder %s106, %s107
    %p118 = scmp.eq.s32.totalorder %s14, 0
    %p119 = por %p117, %p118
    %p120 = scmp.ne.s32.totalorder %s106, %s107
    %p121 = scmp.eq.s32.totalorder %s15, 1
    %p122 = por %p120, %p121
    %p124 = scmp.ne.s32.totalorder %s107, %s123
    %p125 = scmp.eq.s32.totalorder %s15, 0
    %p126 = por %p124, %p125
    %p127 = scmp.le.s32.totalorder 1, %s9
    %p128 = scmp.lt.s32.totalorder %s9, 3
    %p129 = pnand %p127, %p128
    %p130 = pneg %p129
    // Predicated region
    $region9: #{tpu_custom_call.1} parent=5 // pred_check
      _
    $region10: #{tpu_custom_call.1} parent=5 // pred_check_branch
      %132 = sbr.rel (%p129) target = $region12
    $region11: #{tpu_custom_call.1} parent=5 // pred_region
      %s133 = ssub.s32 %s9, 1
      // Predicated region
      $region13: #{tpu_custom_call.1} parent=11 // pred_check
        %p134 = pneg %p70
      $region14: #{tpu_custom_call.1} parent=11 // pred_check_branch
        %136 = sbr.rel (%p134) target = $region16
      $region15: #{tpu_custom_call.1} parent=11 // pred_region
        _
      $region16: #{tpu_custom_call.1} parent=11 // pred_fallthru
        _
      // Predicated region
      $region17: #{tpu_custom_call.1} parent=11 // pred_check
        %p137 = pneg %p91
      $region18: #{tpu_custom_call.1} parent=11 // pred_check_branch
        %139 = sbr.rel (%p137) target = $region20
      $region19: #{tpu_custom_call.1} parent=11 // pred_region
        _
      $region20: #{tpu_custom_call.1} parent=11 // pred_fallthru
        _
    $region12: #{tpu_custom_call.1} parent=5 // pred_fallthru
      _
    %p140 = scmp.lt.s32.totalorder %s9, 2
    // Predicated region
    $region21: #{tpu_custom_call.1} parent=5 // pred_check
      %p141 = pneg %p140
    $region22: #{tpu_custom_call.1} parent=5 // pred_check_branch
      %143 = sbr.rel (%p141) target = $region24
    $region23: #{tpu_custom_call.1} parent=5 // pred_region
      // Predicated region
      $region25: #{tpu_custom_call.1} parent=23 // pred_check
        %p144 = pneg %p43
      $region26: #{tpu_custom_call.1} parent=23 // pred_check_branch
        %146 = sbr.rel (%p144) target = $region28
      $region27: #{tpu_custom_call.1} parent=23 // pred_region
        %s147 = smul.u32 2, %s17
        %p148 = scmp.lt.s32.totalorder %s16, 1
        %s149 = scalar_select %p148, %s16, 1
        %p150 = scmp.lt.s32.totalorder %s147, 1
        %s151 = scalar_select %p150, %s147, 1
        %s152 = smul.addr %s149, 2
        %s153 = sadd.s32 %s151, %s152
        %s154 = smul.addr %s153, 4
        %s155 = scalar_lea.vmem %s0, %s154
        %s156 = smul.u32 2, %s17
      $region28: #{tpu_custom_call.1} parent=23 // pred_fallthru
        _
    $region24: #{tpu_custom_call.1} parent=5 // pred_fallthru
      _
    %p157 = scmp.le.s32.totalorder 1, %s9
    %p158 = scmp.lt.s32.totalorder %s9, 3
    %p159 = pnand %p157, %p158
    %p160 = pneg %p159
    // Predicated region
    $region29: #{tpu_custom_call.1} parent=5 // pred_check
      _
    $region30: #{tpu_custom_call.1} parent=5 // pred_check_branch
      %162 = sbr.rel (%p159) target = $region32
    $region31: #{tpu_custom_call.1} parent=5 // pred_region
      %s163 = ssub.s32 %s9, 1
      %s164 = smul.u32 2, %s19
      %p165 = scmp.lt.s32.totalorder %s18, 1
      %s166 = scalar_select %p165, %s18, 1
      %p167 = scmp.lt.s32.totalorder %s164, 1
      %s168 = scalar_select %p167, %s164, 1
      %s169 = smul.addr %s166, 2
      %s170 = sadd.s32 %s168, %s169
      %s171 = smul.addr %s170, 4
      %s172 = scalar_lea.vmem %s0, %s171
      %p173 = pneg %p49
      %p174 = pneg %p46
      %p175 = pneg %p70
      %p176 = pneg %p67
      %p177 = pneg %p91
      %p178 = pneg %p88
      %p179 = pneg %p119
      %p180 = pneg %p116
      %s181 = smul.u32 2, %s19
      %p182 = scmp.lt.s32.totalorder %s18, 1
      %s183 = scalar_select %p182, %s18, 1
      %p184 = scmp.lt.s32.totalorder %s181, 1
      %s185 = scalar_select %p184, %s181, 1
      %s186 = smul.addr %s183, 4
      %s187 = sadd.s32 %s185, %s186
      %s188 = smul.addr %s187, 8
      %s189 = scalar_lea.vmem %s3, %s188
      %s190 = smul.u32 2, %s19
      %p191 = scmp.lt.s32.totalorder %s18, 1
      %s192 = scalar_select %p191, %s18, 1
      %p193 = scmp.lt.s32.totalorder %s190, 1
      %s194 = scalar_select %p193, %s190, 1
      %s195 = smul.addr %s192, 2
      %s196 = sadd.s32 %s194, %s195
      %s197 = smul.addr %s196, 4
      %s198 = scalar_lea.vmem %s0, %s197
      %s199 = smul.u32 2, %s19
      %s200 = smul.u32 2, %s19
      %p201 = scmp.lt.s32.totalorder %s18, 1
      %s202 = scalar_select %p201, %s18, 1
      %p203 = scmp.lt.s32.totalorder %s200, 1
      %s204 = scalar_select %p203, %s200, 1
      %s205 = smul.addr %s202, 4
      %s206 = sadd.s32 %s204, %s205
      %s207 = smul.addr %s206, 8
      %s208 = scalar_lea.vmem %s3, %s207
      %s209 = smul.u32 2, %s19
      %v210 = vld [vmem:[%s1] sm:$0xff]
      %v211 = vld [vmem:[%s1 + $0x8] sm:$0x7f]
      %v212 = vld [vmem:[%s198] sm:$0xff]
      %v213 = vld [vmem:[%s2] sm:$0xff]
      %v214 = vld [vmem:[%s2 + $0x8] sm:$0x7f]
      %216 = vset.pattern.permute.xlu0 0
      %217 = vperm.xlu0 %216, %v213
      %v218 = vpop.permute.xlu0 %217
      %221 = vset.pattern.permute.xlu0 0
      %222 = vperm.xlu0 %221, %v214
      %v223 = vpop.permute.xlu0 %222
      %226 = vst [vmem:[#allocation1] ss:$2 sm:$0xff] %v212
      %v227 = vld.sshfl [vmem:[#allocation1] sm:$0xff pattern:$0x75316420]
      %v228 = vld.sshfl [vmem:[#allocation1 + $0x8] sm:$0xff pattern:$0x75316420]
      %vm229 = vcmask 31744
      %v231 = vsel %vm229, %v210, 0
      %v234 = vsel %vm229, %v211, 0
      %vm236 = vcmask 1043456
      %v237 = vsel %vm236, %v227, 0
      %v239 = vsel %vm236, %v228, 0
      %241 = vmatpush.msra.mxu0 0.0
      %242 = vmatpush.msra.mxu0 0.0
      %243 = vmatpush.msra.mxu0 0.0
      %244 = vmatpush.msra.mxu0 0.0
      %245 = vmatpush.msra.mxu0 0.0
      %246 = vmatpush.msra.mxu0 0.0
      %247 = vmatpush.msra.mxu0 0.0
      %248 = vmatpush.msra.mxu0 0.0
      %249 = vmatpush.msra.mxu0 0.0
      %250 = vmatpush.msra.mxu0 0.0
      %251 = vmatpush.msra.mxu0 0.0
      %252 = vmatpush.msra.mxu0 0.0
      %253 = vmatpush.msra.mxu0 0.0
      %254 = vmatpush.msra.mxu0 0.0
      %255 = vmatpush.msra.mxu0 0.0
      %256 = vmatpush.msra.mxu0 %v237
      %257 = vmatmul.f32.gmra.mxu0 %v231
      %v258 = vpop.f32.mrf.mxu0
      %v259 = vadd.f32 %v218, %v258
      %260 = vmatmul.f32.gmra.mxu0 %v234
      %v261 = vpop.f32.mrf.mxu0
      %v262 = vadd.f32 %v223, %v261
      %263 = vdwg.mxu0
      %264 = vmatpush.msra.mxu0 0.0
      %265 = vmatpush.msra.mxu0 0.0
      %266 = vmatpush.msra.mxu0 0.0
      %267 = vmatpush.msra.mxu0 0.0
      %268 = vmatpush.msra.mxu0 0.0
      %269 = vmatpush.msra.mxu0 0.0
      %270 = vmatpush.msra.mxu0 0.0
      %271 = vmatpush.msra.mxu0 0.0
      %272 = vmatpush.msra.mxu0 0.0
      %273 = vmatpush.msra.mxu0 0.0
      %274 = vmatpush.msra.mxu0 0.0
      %275 = vmatpush.msra.mxu0 0.0
      %276 = vmatpush.msra.mxu0 0.0
      %277 = vmatpush.msra.mxu0 0.0
      %278 = vmatpush.msra.mxu0 0.0
      %279 = vmatpush.msra.mxu0 %v239
      %280 = vmatmul.f32.gmra.mxu0 %v231
      %v281 = vpop.f32.mrf.mxu0
      %v282 = vadd.f32 %v218, %v281
      %283 = vmatmul.f32.gmra.mxu0 %v234
      %v284 = vpop.f32.mrf.mxu0
      %v285 = vadd.f32 %v223, %v284
      %286 = vdwg.mxu0
      %287 = vst [vmem:[%s208] sm:$0xff] %v259
      %288 = vst [vmem:[%s208 + $0x8] sm:$0xff] %v282
      %289 = vst [vmem:[%s208 + $0x10] sm:$0x7f] %v262
      %290 = vst [vmem:[%s208 + $0x18] sm:$0x7f] %v285
      %s291 = smul.u32 2, %s19
      %p292 = scmp.lt.s32.totalorder %s18, 1
      %s293 = scalar_select %p292, %s18, 1
      %p294 = scmp.lt.s32.totalorder %s291, 1
      %s295 = scalar_select %p294, %s291, 1
      %s296 = smul.addr %s293, 4
      %s297 = sadd.s32 %s295, %s296
      %s298 = smul.addr %s297, 8
      %s299 = scalar_lea.vmem %s3, %s298
      // Predicated region
      $region33: #{tpu_custom_call.1} parent=31 // pred_check
        %p300 = pneg %p116
      $region34: #{tpu_custom_call.1} parent=31 // pred_check_branch
        %302 = sbr.rel (%p300) target = $region36
      $region35: #{tpu_custom_call.1} parent=31 // pred_region
        %s303 = smul.u32 2, %s19
      $region36: #{tpu_custom_call.1} parent=31 // pred_fallthru
        _
    $region32: #{tpu_custom_call.1} parent=5 // pred_fallthru
      _
    %p304 = scmp.le.s32.totalorder 2, %s9
    // Predicated region
    $region37: #{tpu_custom_call.1} parent=5 // pred_check
      %p305 = pneg %p304
    $region38: #{tpu_custom_call.1} parent=5 // pred_check_branch
      %307 = sbr.rel (%p305) target = $region40
    $region39: #{tpu_custom_call.1} parent=5 // pred_region
      %s308 = ssub.s32 %s9, 2
      // Predicated region
      $region41: #{tpu_custom_call.1} parent=39 // pred_check
        %p309 = pneg %p122
      $region42: #{tpu_custom_call.1} parent=39 // pred_check_branch
        %311 = sbr.rel (%p309) target = $region44
      $region43: #{tpu_custom_call.1} parent=39 // pred_region
        %s312 = smul.u32 2, %s21
        %p313 = scmp.lt.s32.totalorder %s20, 1
        %s314 = scalar_select %p313, %s20, 1
        %p315 = scmp.lt.s32.totalorder %s312, 1
        %s316 = scalar_select %p315, %s312, 1
        %s317 = smul.addr %s314, 4
        %s318 = sadd.s32 %s316, %s317
        %s319 = smul.addr %s318, 8
        %s320 = scalar_lea.vmem %s3, %s319
      $region44: #{tpu_custom_call.1} parent=39 // pred_fallthru
        _
    $region40: #{tpu_custom_call.1} parent=5 // pred_fallthru
      _
  $region6: #{tpu_custom_call.1} parent=0 // loop_footer
    %s13 = sadd.s32 1, %s9
  $region7: #{tpu_custom_call.1} parent=0 // loop_footer_branch
    %8 = sbr.rel target = $region3
  $region8: #{tpu_custom_call.1} parent=0 // loop_exit
    _

</llo_original>
